<compile_context>
chip_gen: v6e
topology: v6e:2x2x1
jax: 0.10.0
libtpu: 0.0.40
codegen_flags: <defaults>
</compile_context>

<pallas_src>
import jax
import jax.numpy as jnp
from jax.experimental import pallas as pl
from jax.experimental.pallas import tpu as pltpu


def _round_up(x, m):
    return pl.cdiv(x, m) * m


def _mlp_kernel(x_ref, w1_ref, b1_ref, w2_ref, b2_ref, o_ref):
    # Two MXU matmuls + bias adds + ReLU, all on f32 accumulators.
    x = x_ref[...]                                        # (Bt, F)
    h = jnp.dot(x, w1_ref[...],
                preferred_element_type=jnp.float32)       # (Bt, Hp) on MXU
    h = jnp.maximum(h + b1_ref[...], 0.0)                 # bias + ReLU on VPU
    y = jnp.dot(h, w2_ref[...],
                preferred_element_type=jnp.float32)       # (Bt, Op) on MXU
    o_ref[...] = (y + b2_ref[...]).astype(o_ref.dtype)    # lane-dense store


def mlp_forward(x, w1, b1, w2, b2, *, block_b=512):
    """x: (B, F); w1: (F, H); b1: (1, H); w2: (H, O); b2: (1, O) -> (B, O)."""
    B, F = x.shape
    H = w1.shape[1]
    O = w2.shape[1]

    # Lane-dense padded dims (multiples of 128) for hidden and output.
    Hp = _round_up(max(H, 1), 128)
    Op = _round_up(max(O, 1), 128)

    # Batch tile: multiple of 8 (f32 sublane), capped by block_b.
    Bt = min(_round_up(max(B, 1), 8), _round_up(block_b, 8))
    Bp = _round_up(B, Bt)
    n_tiles = Bp // Bt

    # One-time zero padding of weights/biases (and batch pad for x if needed).
    w1p = jnp.pad(w1, ((0, 0), (0, Hp - H)))
    b1p = jnp.pad(b1, ((0, 0), (0, Hp - H)))
    w2p = jnp.pad(w2, ((0, Hp - H), (0, Op - O)))
    b2p = jnp.pad(b2, ((0, 0), (0, Op - O)))
    xp = jnp.pad(x, ((0, Bp - B), (0, 0))) if Bp != B else x

    flops = 2 * Bp * (F * Hp + Hp * Op)
    bytes_accessed = (xp.size + w1p.size + b1p.size + w2p.size + b2p.size
                      + Bp * Op) * 4

    out = pl.pallas_call(
        _mlp_kernel,
        out_shape=jax.ShapeDtypeStruct((Bp, Op), x.dtype),
        grid=(n_tiles,),
        in_specs=[
            pl.BlockSpec((Bt, F), lambda b: (b, 0)),    # x tile per grid step
            pl.BlockSpec((F, Hp), lambda b: (0, 0)),    # weights stay resident
            pl.BlockSpec((1, Hp), lambda b: (0, 0)),
            pl.BlockSpec((Hp, Op), lambda b: (0, 0)),
            pl.BlockSpec((1, Op), lambda b: (0, 0)),
        ],
        out_specs=pl.BlockSpec((Bt, Op), lambda b: (b, 0)),
        compiler_params=pltpu.CompilerParams(
            dimension_semantics=("parallel",)),
        cost_estimate=pl.CostEstimate(
            flops=flops, transcendentals=0, bytes_accessed=bytes_accessed),
    )(xp, w1p, b1p, w2p, b2p)

    # Strip batch/output padding.
    return out[:B, :O]


if __name__ == "__main__":
    # Shapes implied by the module: x (batch, n_feature); hidden n_hidden; out n_output.
    batch, n_feature, n_hidden, n_output = 64, 16, 32, 4

    key = jax.random.PRNGKey(0)
    kx, kw1, kb1, kw2, kb2 = jax.random.split(key, 5)

    # Deterministic "PyTorch-like" init (uniform in +/- 1/sqrt(fan_in)).
    x = jax.random.normal(kx, (batch, n_feature), dtype=jnp.float32)
    lim1 = 1.0 / jnp.sqrt(jnp.float32(n_feature))
    w1 = jax.random.uniform(kw1, (n_feature, n_hidden), jnp.float32, -lim1, lim1)
    b1 = jax.random.uniform(kb1, (1, n_hidden), jnp.float32, -lim1, lim1)
    lim2 = 1.0 / jnp.sqrt(jnp.float32(n_hidden))
    w2 = jax.random.uniform(kw2, (n_hidden, n_output), jnp.float32, -lim2, lim2)
    b2 = jax.random.uniform(kb2, (1, n_output), jnp.float32, -lim2, lim2)

    # block_b=32 so the small demo batch still exercises a multi-step grid.
    out = mlp_forward(x, w1, b1, w2, b2, block_b=32)
    out = jax.block_until_ready(out)

    # Pure-JAX reference check of the forward semantics.
    ref = jnp.maximum(x @ w1 + b1, 0.0) @ w2 + b2
    assert out.shape == (batch, n_output)
    assert jnp.allclose(out, ref, atol=1e-5, rtol=1e-5)

    print("KERNEL_OK")
</pallas_src>

<mosaic_0001>
module attributes {stable_mosaic.version = 11 : i64} {
  func.func @_mlp_kernel(%arg0: i32, %arg1: memref<32x16xf32, #tpu.memory_space<vmem>>, %arg2: memref<16x128xf32, #tpu.memory_space<vmem>>, %arg3: memref<1x128xf32, #tpu.memory_space<vmem>>, %arg4: memref<128x128xf32, #tpu.memory_space<vmem>>, %arg5: memref<1x128xf32, #tpu.memory_space<vmem>>, %arg6: memref<32x128xf32, #tpu.memory_space<vmem>>) attributes {dimension_semantics = [#tpu.dimension_semantics<parallel>], iteration_bounds = array<i64: 2>, scalar_prefetch = 0 : i64, scratch_operands = 0 : i64, tpu.core_type = #tpu.core_type<tc>, window_params = [{transform_indices = @transform_0, window_bounds = array<i64: 32, 16>}, {pipeline_mode = #tpu.pipeline_mode<synchronous>, transform_indices = @transform_1, window_bounds = array<i64: 16, 128>}, {pipeline_mode = #tpu.pipeline_mode<synchronous>, transform_indices = @transform_2, window_bounds = array<i64: 1, 128>}, {pipeline_mode = #tpu.pipeline_mode<synchronous>, transform_indices = @transform_3, window_bounds = array<i64: 128, 128>}, {pipeline_mode = #tpu.pipeline_mode<synchronous>, transform_indices = @transform_4, window_bounds = array<i64: 1, 128>}, {transform_indices = @transform_5, window_bounds = array<i64: 32, 128>}]} {
    %c0 = arith.constant 0 : index
    %c0_0 = arith.constant 0 : index
    %0 = vector.load %arg1[%c0, %c0_0] : memref<32x16xf32, #tpu.memory_space<vmem>>, vector<32x16xf32>
    %c0_1 = arith.constant 0 : index
    %c0_2 = arith.constant 0 : index
    %1 = vector.load %arg2[%c0_1, %c0_2] : memref<16x128xf32, #tpu.memory_space<vmem>>, vector<16x128xf32>
    %cst = arith.constant dense<0.000000e+00> : vector<32x128xf32>
    %2 = tpu.matmul %0, %1, %cst {dimension_numbers = #tpu.dot_dimension_numbers<[1], [0], [0], [1], [0, 0, 1, 1], [], []>} : vector<32x16xf32>, vector<16x128xf32>, vector<32x128xf32> -> vector<32x128xf32>
    %c0_3 = arith.constant 0 : index
    %c0_4 = arith.constant 0 : index
    %3 = vector.load %arg3[%c0_3, %c0_4] : memref<1x128xf32, #tpu.memory_space<vmem>>, vector<1x128xf32>
    %4 = vector.broadcast %3 : vector<1x128xf32> to vector<32x128xf32>
    %5 = arith.addf %2, %4 : vector<32x128xf32>
    %cst_5 = arith.constant 0.000000e+00 : f32
    %6 = vector.broadcast %cst_5 : f32 to vector<32x128xf32>
    %7 = arith.maximumf %5, %6 : vector<32x128xf32>
    %c0_6 = arith.constant 0 : index
    %c0_7 = arith.constant 0 : index
    %8 = vector.load %arg4[%c0_6, %c0_7] : memref<128x128xf32, #tpu.memory_space<vmem>>, vector<128x128xf32>
    %cst_8 = arith.constant dense<0.000000e+00> : vector<32x128xf32>
    %9 = tpu.matmul %7, %8, %cst_8 {dimension_numbers = #tpu.dot_dimension_numbers<[1], [0], [0], [1], [0, 0, 1, 1], [], []>} : vector<32x128xf32>, vector<128x128xf32>, vector<32x128xf32> -> vector<32x128xf32>
    %c0_9 = arith.constant 0 : index
    %c0_10 = arith.constant 0 : index
    %10 = vector.load %arg5[%c0_9, %c0_10] : memref<1x128xf32, #tpu.memory_space<vmem>>, vector<1x128xf32>
    %11 = vector.broadcast %10 : vector<1x128xf32> to vector<32x128xf32>
    %12 = arith.addf %9, %11 : vector<32x128xf32>
    %c0_11 = arith.constant 0 : index
    %c0_12 = arith.constant 0 : index
    %13 = vector.load %arg6[%c0_11, %c0_12] : memref<32x128xf32, #tpu.memory_space<vmem>>, vector<32x128xf32>
    tpu.vector_store %arg6[%c0_11, %c0_12], %12 {strides = array<i32>} : memref<32x128xf32, #tpu.memory_space<vmem>>, vector<32x128xf32>,
    return
  }
  func.func @transform_0(%arg0: i32) -> (i32, i32) {
    %c0_i32 = arith.constant 0 : i32
    %c0_i32_0 = arith.constant 0 : i32
    return %arg0, %c0_i32 : i32, i32
  }
  func.func @transform_1(%arg0: i32) -> (i32, i32) {
    %c0_i32 = arith.constant 0 : i32
    %c0_i32_0 = arith.constant 0 : i32
    %c0_i32_1 = arith.constant 0 : i32
    return %c0_i32, %c0_i32_0 : i32, i32
  }
  func.func @transform_2(%arg0: i32) -> (i32, i32) {
    %c0_i32 = arith.constant 0 : i32
    %c0_i32_0 = arith.constant 0 : i32
    %c0_i32_1 = arith.constant 0 : i32
    return %c0_i32, %c0_i32_0 : i32, i32
  }
  func.func @transform_3(%arg0: i32) -> (i32, i32) {
    %c0_i32 = arith.constant 0 : i32
    %c0_i32_0 = arith.constant 0 : i32
    %c0_i32_1 = arith.constant 0 : i32
    return %c0_i32, %c0_i32_0 : i32, i32
  }
  func.func @transform_4(%arg0: i32) -> (i32, i32) {
    %c0_i32 = arith.constant 0 : i32
    %c0_i32_0 = arith.constant 0 : i32
    %c0_i32_1 = arith.constant 0 : i32
    return %c0_i32, %c0_i32_0 : i32, i32
  }
  func.func @transform_5(%arg0: i32) -> (i32, i32) {
    %c0_i32 = arith.constant 0 : i32
    %c0_i32_0 = arith.constant 0 : i32
    return %arg0, %c0_i32 : i32, i32
  }
}

</mosaic_0001>

<llo_original>
// kernel: tpu_custom_call.1
$region0: #{tpu_custom_call.1}
  #allocation0 [shape = 'u32[]', space=smem, size = 0x4, offset = 0x4, fixed_abs, tag = 'smem constant byte address 0x4 - core index']
  #allocation1 [shape = 'u32[144,128]{1,0:T(1,128)}', space=vmem, size = 0x12000, scoped, tag = 'internal scratch']
  %s0 = inlined_call_operand.vmem [shape: f32[64,16], index: 0, kind: input, shape index: {}]
  %s1 = inlined_call_operand.vmem [shape: f32[16,128], index: 1, kind: input, shape index: {}]
  %s2 = inlined_call_operand.vmem [shape: f32[1,128], index: 2, kind: input, shape index: {}]
  %s3 = inlined_call_operand.hbm [shape: f32[128,128], index: 3, kind: input, shape index: {}]
  %s4 = inlined_call_operand.vmem [shape: f32[1,128], index: 4, kind: input, shape index: {}]
  %s5 = inlined_call_operand.hbm [shape: f32[64,128], index: 5, kind: output, shape index: {}]
  %s6 = sld [smem:[#allocation0]]
  $region57: #{tpu_custom_call.1} parent=0
    _
  %s8 = ssub.s32 1, %s6
  %s9 = scalar_select 0, %s8, %s6
  $region1: #{tpu_custom_call.1} parent=0
    #allocation2 [shape = 'u8[65536]{0}', space=vmem, size = 0x10000, scoped, tag = 'input window, operand 3, single buffered']
    #allocation3 [shape = 's32[2]{0}', space=sflag, size = 0x8, scoped, tag = 'scoped memory for tpu_custom_call.1']
    #allocation4 [shape = 's32[2]{0}', space=sflag, size = 0x8, scoped, tag = 'scoped memory for tpu_custom_call.1']
    #allocation5 [shape = 'u8[32768]{0}', space=vmem, size = 0x8000, scoped, tag = 'output window, operand 0']
    %10 = vsyncpa [#allocation3], 0
    %11 = vsyncpa [#allocation4], 0
    %s12 = scalar_lea.sflag [#allocation4], 1
    %13 = vsyncpa %s12, 0
    loop: start=0, step=1, limit=4
    $region2: #{tpu_custom_call.1} parent=1 // loop_pre_header
      _
    $region3: #{tpu_custom_call.1} parent=1 // loop_header
      %s15 = sphi 0, %s19
      %p16 = scmp.ge.s32.totalorder %s15, 4
      %s25 = sphi 0, %s27
      %s28 = sphi 0, %s25
      %s29 = sphi 0, %s28
      %s45 = sphi 0, %s29
      %s49 = sphi 0, %s49
      %s51 = sphi 0, %s49
      %s52 = sphi 0, %s51
      %s66 = sphi 0, %s52
      %s70 = sphi 0, %s70
      %s72 = sphi 0, %s70
      %s73 = sphi 0, %s72
      %s87 = sphi 0, %s73
      %s91 = sphi 0, %s91
      %s93 = sphi 0, %s91
      %s94 = sphi 0, %s93
      %s108 = sphi 0, %s94
      %s112 = sphi 0, %s112
      %s114 = sphi 0, %s112
      %s115 = sphi 0, %s114
      %s129 = sphi 0, %s115
      %s135 = sphi 0, %s137
      %s138 = sphi 0, %s135
      %s139 = sphi 0, %s138
      %s155 = sphi 0, %s139
    $region4: #{tpu_custom_call.1} parent=1 // loop_header_branch
      %18 = sbr.rel (%p16) target = $region8
    $region5: #{tpu_custom_call.1} parent=1 // loop_body
      %s20 = ssub.s32 %s15, 1
      %s21 = ssub.s32 %s15, 2
      %s22 = sadd.s32 %s15, 1
      %s23 = ssub.s32 %s15, %s22
      %p24 = scmp.eq.s32.totalorder %s23, 0
      %s26 = sadd.s32 %s25, 1
      %s27 = scalar_select %p24, %s25, %s26
      %p30 = pneg %p24
      %p31 = scmp.eq.s32.totalorder %s15, 1
      %p32 = por %p30, %p31
      %p33 = scmp.ne.s32.totalorder %s25, %s28
      %p34 = scmp.eq.s32.totalorder %s15, 0
      %p35 = por %p33, %p34
      %p36 = scmp.ne.s32.totalorder %s25, %s28
      %p37 = scmp.eq.s32.totalorder %s20, 1
      %p38 = por %p36, %p37
      %p39 = scmp.ne.s32.totalorder %s28, %s29
      %p40 = scmp.eq.s32.totalorder %s20, 0
      %p41 = por %p39, %p40
      %p42 = scmp.ne.s32.totalorder %s28, %s29
      %p43 = scmp.eq.s32.totalorder %s21, 1
      %p44 = por %p42, %p43
      %p46 = scmp.ne.s32.totalorder %s29, %s45
      %p47 = scmp.eq.s32.totalorder %s21, 0
      %p48 = por %p46, %p47
      %s50 = sadd.s32 %s49, 1
      %p53 = scmp.eq.s32.totalorder %s15, 1
      %p54 = scmp.ne.s32.totalorder %s49, %s51
      %p55 = scmp.eq.s32.totalorder %s15, 0
      %p56 = por %p54, %p55
      %p57 = scmp.ne.s32.totalorder %s49, %s51
      %p58 = scmp.eq.s32.totalorder %s20, 1
      %p59 = por %p57, %p58
      %p60 = scmp.ne.s32.totalorder %s51, %s52
      %p61 = scmp.eq.s32.totalorder %s20, 0
      %p62 = por %p60, %p61
      %p63 = scmp.ne.s32.totalorder %s51, %s52
      %p64 = scmp.eq.s32.totalorder %s21, 1
      %p65 = por %p63, %p64
      %p67 = scmp.ne.s32.totalorder %s52, %s66
      %p68 = scmp.eq.s32.totalorder %s21, 0
      %p69 = por %p67, %p68
      %s71 = sadd.s32 %s70, 1
      %p74 = scmp.eq.s32.totalorder %s15, 1
      %p75 = scmp.ne.s32.totalorder %s70, %s72
      %p76 = scmp.eq.s32.totalorder %s15, 0
      %p77 = por %p75, %p76
      %p78 = scmp.ne.s32.totalorder %s70, %s72
      %p79 = scmp.eq.s32.totalorder %s20, 1
      %p80 = por %p78, %p79
      %p81 = scmp.ne.s32.totalorder %s72, %s73
      %p82 = scmp.eq.s32.totalorder %s20, 0
      %p83 = por %p81, %p82
      %p84 = scmp.ne.s32.totalorder %s72, %s73
      %p85 = scmp.eq.s32.totalorder %s21, 1
      %p86 = por %p84, %p85
      %p88 = scmp.ne.s32.totalorder %s73, %s87
      %p89 = scmp.eq.s32.totalorder %s21, 0
      %p90 = por %p88, %p89
      %s92 = sadd.s32 %s91, 1
      %p95 = scmp.eq.s32.totalorder %s15, 1
      %p96 = scmp.ne.s32.totalorder %s91, %s93
      %p97 = scmp.eq.s32.totalorder %s15, 0
      %p98 = por %p96, %p97
      %p99 = scmp.ne.s32.totalorder %s91, %s93
      %p100 = scmp.eq.s32.totalorder %s20, 1
      %p101 = por %p99, %p100
      %p102 = scmp.ne.s32.totalorder %s93, %s94
      %p103 = scmp.eq.s32.totalorder %s20, 0
      %p104 = por %p102, %p103
      %p105 = scmp.ne.s32.totalorder %s93, %s94
      %p106 = scmp.eq.s32.totalorder %s21, 1
      %p107 = por %p105, %p106
      %p109 = scmp.ne.s32.totalorder %s94, %s108
      %p110 = scmp.eq.s32.totalorder %s21, 0
      %p111 = por %p109, %p110
      %s113 = sadd.s32 %s112, 1
      %p116 = scmp.eq.s32.totalorder %s15, 1
      %p117 = scmp.ne.s32.totalorder %s112, %s114
      %p118 = scmp.eq.s32.totalorder %s15, 0
      %p119 = por %p117, %p118
      %p120 = scmp.ne.s32.totalorder %s112, %s114
      %p121 = scmp.eq.s32.totalorder %s20, 1
      %p122 = por %p120, %p121
      %p123 = scmp.ne.s32.totalorder %s114, %s115
      %p124 = scmp.eq.s32.totalorder %s20, 0
      %p125 = por %p123, %p124
      %p126 = scmp.ne.s32.totalorder %s114, %s115
      %p127 = scmp.eq.s32.totalorder %s21, 1
      %p128 = por %p126, %p127
      %p130 = scmp.ne.s32.totalorder %s115, %s129
      %p131 = scmp.eq.s32.totalorder %s21, 0
      %p132 = por %p130, %p131
      %s133 = ssub.s32 %s15, %s22
      %p134 = scmp.eq.s32.totalorder %s133, 0
      %s136 = sadd.s32 %s135, 1
      %s137 = scalar_select %p134, %s135, %s136
      %p140 = pneg %p134
      %p141 = scmp.eq.s32.totalorder %s15, 1
      %p142 = por %p140, %p141
      %p143 = scmp.ne.s32.totalorder %s135, %s138
      %p144 = scmp.eq.s32.totalorder %s15, 0
      %p145 = por %p143, %p144
      %p146 = scmp.ne.s32.totalorder %s135, %s138
      %p147 = scmp.eq.s32.totalorder %s20, 1
      %p148 = por %p146, %p147
      %p149 = scmp.ne.s32.totalorder %s138, %s139
      %p150 = scmp.eq.s32.totalorder %s20, 0
      %p151 = por %p149, %p150
      %p152 = scmp.ne.s32.totalorder %s138, %s139
      %p153 = scmp.eq.s32.totalorder %s21, 1
      %p154 = por %p152, %p153
      %p156 = scmp.ne.s32.totalorder %s139, %s155
      %p157 = scmp.eq.s32.totalorder %s21, 0
      %p158 = por %p156, %p157
      %p159 = scmp.le.s32.totalorder 1, %s15
      %p160 = scmp.lt.s32.totalorder %s15, 3
      %p161 = pnand %p159, %p160
      %p162 = pneg %p161
      // Predicated region
      $region9: #{tpu_custom_call.1} parent=5 // pred_check
        _
      $region10: #{tpu_custom_call.1} parent=5 // pred_check_branch
        %164 = sbr.rel (%p161) target = $region12
      $region11: #{tpu_custom_call.1} parent=5 // pred_region
        %s165 = ssub.s32 %s15, 1
        // Predicated region
        $region13: #{tpu_custom_call.1} parent=11 // pred_check
          %p166 = pneg %p62
        $region14: #{tpu_custom_call.1} parent=11 // pred_check_branch
          %168 = sbr.rel (%p166) target = $region16
        $region15: #{tpu_custom_call.1} parent=11 // pred_region
          _
        $region16: #{tpu_custom_call.1} parent=11 // pred_fallthru
          _
        // Predicated region
        $region17: #{tpu_custom_call.1} parent=11 // pred_check
          %p169 = pneg %p83
        $region18: #{tpu_custom_call.1} parent=11 // pred_check_branch
          %171 = sbr.rel (%p169) target = $region20
        $region19: #{tpu_custom_call.1} parent=11 // pred_region
          _
        $region20: #{tpu_custom_call.1} parent=11 // pred_fallthru
          _
        // Predicated region
        $region21: #{tpu_custom_call.1} parent=11 // pred_check
          %p172 = pneg %p104
        $region22: #{tpu_custom_call.1} parent=11 // pred_check_branch
          %174 = sbr.rel (%p172) target = $region24
        $region23: #{tpu_custom_call.1} parent=11 // pred_region
          %s176 = ssub.s32 2048, 2048
          %177 = vsyncadd [#allocation3], %s176
          %s178 = sshll.u32 [#allocation2], 4
          %s179 = int_to_ptr.vmem [resolvable:$true] %s178
          %184 = dma.hbm_to_vmem [thread:$0]  %s3, 2048, %s179, [#allocation3], 128, 128, 8
        $region24: #{tpu_custom_call.1} parent=11 // pred_fallthru
          _
        // Predicated region
        $region25: #{tpu_custom_call.1} parent=11 // pred_check
          %p185 = pneg %p125
        $region26: #{tpu_custom_call.1} parent=11 // pred_check_branch
          %187 = sbr.rel (%p185) target = $region28
        $region27: #{tpu_custom_call.1} parent=11 // pred_region
          _
        $region28: #{tpu_custom_call.1} parent=11 // pred_fallthru
          _
      $region12: #{tpu_custom_call.1} parent=5 // pred_fallthru
        _
      %p188 = scmp.lt.s32.totalorder %s15, 2
      // Predicated region
      $region29: #{tpu_custom_call.1} parent=5 // pred_check
        %p189 = pneg %p188
      $region30: #{tpu_custom_call.1} parent=5 // pred_check_branch
        %191 = sbr.rel (%p189) target = $region32
      $region31: #{tpu_custom_call.1} parent=5 // pred_region
        // Predicated region
        $region33: #{tpu_custom_call.1} parent=31 // pred_check
          %p192 = pneg %p35
        $region34: #{tpu_custom_call.1} parent=31 // pred_check_branch
          %194 = sbr.rel (%p192) target = $region36
        $region35: #{tpu_custom_call.1} parent=31 // pred_region
          %s195 = smul.u32 4, %s15
          %p196 = scmp.lt.s32.totalorder %s195, 7
          %s197 = scalar_select %p196, %s195, 7
          %s198 = smul.addr %s197, 8
          %s199 = scalar_lea.vmem %s0, %s198
          %s200 = smul.u32 4, %s15
        $region36: #{tpu_custom_call.1} parent=31 // pred_fallthru
          _
      $region32: #{tpu_custom_call.1} parent=5 // pred_fallthru
        _
      %p201 = scmp.le.s32.totalorder 1, %s15
      %p202 = scmp.lt.s32.totalorder %s15, 3
      %p203 = pnand %p201, %p202
      %p204 = pneg %p203
      // Predicated region
      $region37: #{tpu_custom_call.1} parent=5 // pred_check
        _
      $region38: #{tpu_custom_call.1} parent=5 // pred_check_branch
        %206 = sbr.rel (%p203) target = $region40
      $region39: #{tpu_custom_call.1} parent=5 // pred_region
        %s207 = ssub.s32 %s15, 1
        // Predicated region
        $region41: #{tpu_custom_call.1} parent=39 // pred_check
          %p208 = pneg %p104
        $region42: #{tpu_custom_call.1} parent=39 // pred_check_branch
          %210 = sbr.rel (%p208) target = $region44
        $region43: #{tpu_custom_call.1} parent=39 // pred_region
          %211 = dma.done [#allocation3], 2048
        $region44: #{tpu_custom_call.1} parent=39 // pred_fallthru
          _
        %s212 = smul.u32 4, %s20
        %p213 = scmp.lt.s32.totalorder %s212, 7
        %s214 = scalar_select %p213, %s212, 7
        %s215 = smul.addr %s214, 8
        %s216 = scalar_lea.vmem %s0, %s215
        %p217 = pneg %p41
        %p218 = pneg %p38
        %p219 = pneg %p62
        %p220 = pneg %p59
        %p221 = pneg %p83
        %p222 = pneg %p80
        %p223 = pneg %p104
        %p224 = pneg %p101
        %p225 = pneg %p125
        %p226 = pneg %p122
        %p227 = pneg %p151
        %p228 = pneg %p148
        %s229 = sand.u32 %s138, 1
        %s230 = scalar_lea.sflag [#allocation4], %s229
        %s231 = sand.u32 %s138, 1
        %s232 = smul.addr %s231, 32
        %s233 = scalar_lea.vmem [#allocation5], %s232
        %s234 = smul.u32 4, %s20
        %p235 = scmp.lt.s32.totalorder %s234, 7
        %s236 = scalar_select %p235, %s234, 7
        %s237 = smul.addr %s236, 8
        %s238 = scalar_lea.vmem %s0, %s237
        %s239 = smul.u32 4, %s20
        %s240 = smul.u32 4, %s20
        %v241 = vld [vmem:[%s238] sm:$0xff]
        %v242 = vld [vmem:[%s238 + $0x8] sm:$0xff]
        %v243 = vld [vmem:[%s238 + $0x10] sm:$0xff]
        %v244 = vld [vmem:[%s238 + $0x18] sm:$0xff]
        %v245 = vld [vmem:[%s1] sm:$0xff]
        %v246 = vld [vmem:[%s1 + $0x8] sm:$0xff]
        %v247 = vld [vmem:[%s2] sm:$0x1]
        %v249 = vlaneseq
        %v250 = vshrl.u32 %v249, 7
        %v251 = vsub.s32 0, %v250
        %v252 = vrot.slane %v247, %v251
        %vm254 = vcmask 130048
        %v256 = vsel %vm254, %v241, 0
        %v259 = vsel %vm254, %v242, 0
        %v262 = vsel %vm254, %v243, 0
        %v265 = vsel %vm254, %v244, 0
        %267 = vmatprep.subr.mxu0 0.0
        %268 = vmatpush1.msra.mxu0 0.0
        %269 = vmatprep.subr.mxu0 0.0
        %270 = vmatpush1.msra.mxu0 0.0
        %271 = vmatprep.subr.mxu0 0.0
        %272 = vmatpush1.msra.mxu0 0.0
        %273 = vmatprep.subr.mxu0 0.0
        %274 = vmatpush1.msra.mxu0 0.0
        %275 = vmatprep.subr.mxu0 0.0
        %276 = vmatpush1.msra.mxu0 0.0
        %277 = vmatprep.subr.mxu0 0.0
        %278 = vmatpush1.msra.mxu0 0.0
        %279 = vmatprep.subr.mxu0 0.0
        %280 = vmatpush1.msra.mxu0 0.0
        %281 = vmatprep.subr.mxu0 0.0
        %282 = vmatpush1.msra.mxu0 0.0
        %283 = vmatprep.subr.mxu0 0.0
        %284 = vmatpush1.msra.mxu0 0.0
        %285 = vmatprep.subr.mxu0 0.0
        %286 = vmatpush1.msra.mxu0 0.0
        %287 = vmatprep.subr.mxu0 0.0
        %288 = vmatpush1.msra.mxu0 0.0
        %289 = vmatprep.subr.mxu0 0.0
        %290 = vmatpush1.msra.mxu0 0.0
        %291 = vmatprep.subr.mxu0 0.0
        %292 = vmatpush1.msra.mxu0 0.0
        %293 = vmatprep.subr.mxu0 0.0
        %294 = vmatpush1.msra.mxu0 0.0
        %295 = vmatprep.subr.mxu0 0.0
        %296 = vmatpush1.msra.mxu0 %v246
        %297 = vmatprep.subr.mxu0 0.0
        %298 = vmatpush1.msra.mxu0 %v245
        %299 = vmatprep.subr.mxu0 0.0
        %300 = vmatpush2.msra.mxu0 0.0
        %301 = vmatprep.subr.mxu0 0.0
        %302 = vmatpush2.msra.mxu0 0.0
        %303 = vmatprep.subr.mxu0 0.0
        %304 = vmatpush2.msra.mxu0 0.0
        %305 = vmatprep.subr.mxu0 0.0
        %306 = vmatpush2.msra.mxu0 0.0
        %307 = vmatprep.subr.mxu0 0.0
        %308 = vmatpush2.msra.mxu0 0.0
        %309 = vmatprep.subr.mxu0 0.0
        %310 = vmatpush2.msra.mxu0 0.0
        %311 = vmatprep.subr.mxu0 0.0
        %312 = vmatpush2.msra.mxu0 0.0
        %313 = vmatprep.subr.mxu0 0.0
        %314 = vmatpush2.msra.mxu0 0.0
        %315 = vmatprep.subr.mxu0 0.0
        %316 = vmatpush2.msra.mxu0 0.0
        %317 = vmatprep.subr.mxu0 0.0
        %318 = vmatpush2.msra.mxu0 0.0
        %319 = vmatprep.subr.mxu0 0.0
        %320 = vmatpush2.msra.mxu0 0.0
        %321 = vmatprep.subr.mxu0 0.0
        %322 = vmatpush2.msra.mxu0 0.0
        %323 = vmatprep.subr.mxu0 0.0
        %324 = vmatpush2.msra.mxu0 0.0
        %325 = vmatprep.subr.mxu0 0.0
        %326 = vmatpush2.msra.mxu0 0.0
        %327 = vmatprep.subr.mxu0 0.0
        %328 = vmatpush2.msra.mxu0 0.0
        %329 = vmatprep.subr.mxu0 0.0
        %330 = vmatpush2.msra.mxu0 0.0
        %331 = vmatprep.mubr.f32.mxu0 0.0
        %332 = vmatmul.mubr.f32.gmra.mxu0 %v256
        %v333 = vpop.f32.mrf.mxu0
        %v334 = vadd.f32 %v252, %v333
        %v335 = vpop.f32.mrf.mxu0
        %336 = vmatprep.mubr.f32.mxu0 0.0
        %337 = vmatmul.mubr.f32.gmra.mxu0 %v259
        %v338 = vpop.f32.mrf.mxu0
        %v339 = vadd.f32 %v252, %v338
        %v340 = vpop.f32.mrf.mxu0
        %341 = vmatprep.mubr.f32.mxu0 0.0
        %342 = vmatmul.mubr.f32.gmra.mxu0 %v262
        %v343 = vpop.f32.mrf.mxu0
        %v344 = vadd.f32 %v252, %v343
        %v345 = vpop.f32.mrf.mxu0
        %346 = vmatprep.mubr.f32.mxu0 0.0
        %347 = vmatmul.mubr.f32.gmra.mxu0 %v265
        %v348 = vpop.f32.mrf.mxu0
        %v349 = vadd.f32 %v252, %v348
        %v350 = vpop.f32.mrf.mxu0
        %351 = vdwg.mxu0
        %v352 = vmax.f32 %v334, 0.0
        %v353 = vmax.f32 %v339, 0.0
        %v354 = vmax.f32 %v344, 0.0
        %v355 = vmax.f32 %v349, 0.0
        %v356 = vld [vmem:[#allocation2] sm:$0xff]
        %v357 = vld [vmem:[#allocation2 + $0x8] sm:$0xff]
        %v358 = vld [vmem:[#allocation2 + $0x10] sm:$0xff]
        %v359 = vld [vmem:[#allocation2 + $0x18] sm:$0xff]
        %v360 = vld [vmem:[#allocation2 + $0x20] sm:$0xff]
        %v361 = vld [vmem:[#allocation2 + $0x28] sm:$0xff]
        %v362 = vld [vmem:[#allocation2 + $0x30] sm:$0xff]
        %v363 = vld [vmem:[#allocation2 + $0x38] sm:$0xff]
        %v364 = vld [vmem:[#allocation2 + $0x40] sm:$0xff]
        %v365 = vld [vmem:[#allocation2 + $0x48] sm:$0xff]
        %v366 = vld [vmem:[#allocation2 + $0x50] sm:$0xff]
        %v367 = vld [vmem:[#allocation2 + $0x58] sm:$0xff]
        %v368 = vld [vmem:[#allocation2 + $0x60] sm:$0xff]
        %v369 = vld [vmem:[#allocation2 + $0x68] sm:$0xff]
        %v370 = vld [vmem:[#allocation2 + $0x70] sm:$0xff]
        %v371 = vld [vmem:[#allocation2 + $0x78] sm:$0xff]
        %v372 = vld [vmem:[%s4] sm:$0x1]
        %v374 = vlaneseq
        %v375 = vshrl.u32 %v374, 7
        %v376 = vsub.s32 0, %v375
        %v377 = vrot.slane %v372, %v376
        %379 = vmatprep.subr.mxu0 0.0
        %380 = vmatpush1.msra.mxu0 %v371
        %381 = vmatprep.subr.mxu0 0.0
        %382 = vmatpush1.msra.mxu0 %v370
        %383 = vmatprep.subr.mxu0 0.0
        %384 = vmatpush1.msra.mxu0 %v369
        %385 = vmatprep.subr.mxu0 0.0
        %386 = vmatpush1.msra.mxu0 %v368
        %387 = vmatprep.subr.mxu0 0.0
        %388 = vmatpush1.msra.mxu0 %v367
        %389 = vmatprep.subr.mxu0 0.0
        %390 = vmatpush1.msra.mxu0 %v366
        %391 = vmatprep.subr.mxu0 0.0
        %392 = vmatpush1.msra.mxu0 %v365
        %393 = vmatprep.subr.mxu0 0.0
        %394 = vmatpush1.msra.mxu0 %v364
        %395 = vmatprep.subr.mxu0 0.0
        %396 = vmatpush1.msra.mxu0 %v363
        %397 = vmatprep.subr.mxu0 0.0
        %398 = vmatpush1.msra.mxu0 %v362
        %399 = vmatprep.subr.mxu0 0.0
        %400 = vmatpush1.msra.mxu0 %v361
        %401 = vmatprep.subr.mxu0 0.0
        %402 = vmatpush1.msra.mxu0 %v360
        %403 = vmatprep.subr.mxu0 0.0
        %404 = vmatpush1.msra.mxu0 %v359
        %405 = vmatprep.subr.mxu0 0.0
        %406 = vmatpush1.msra.mxu0 %v358
        %407 = vmatprep.subr.mxu0 0.0
        %408 = vmatpush1.msra.mxu0 %v357
        %409 = vmatprep.subr.mxu0 0.0
        %410 = vmatpush1.msra.mxu0 %v356
        %411 = vmatprep.subr.mxu0 0.0
        %412 = vmatpush2.msra.mxu0 0.0
        %413 = vmatprep.subr.mxu0 0.0
        %414 = vmatpush2.msra.mxu0 0.0
        %415 = vmatprep.subr.mxu0 0.0
        %416 = vmatpush2.msra.mxu0 0.0
        %417 = vmatprep.subr.mxu0 0.0
        %418 = vmatpush2.msra.mxu0 0.0
        %419 = vmatprep.subr.mxu0 0.0
        %420 = vmatpush2.msra.mxu0 0.0
        %421 = vmatprep.subr.mxu0 0.0
        %422 = vmatpush2.msra.mxu0 0.0
        %423 = vmatprep.subr.mxu0 0.0
        %424 = vmatpush2.msra.mxu0 0.0
        %425 = vmatprep.subr.mxu0 0.0
        %426 = vmatpush2.msra.mxu0 0.0
        %427 = vmatprep.subr.mxu0 0.0
        %428 = vmatpush2.msra.mxu0 0.0
        %429 = vmatprep.subr.mxu0 0.0
        %430 = vmatpush2.msra.mxu0 0.0
        %431 = vmatprep.subr.mxu0 0.0
        %432 = vmatpush2.msra.mxu0 0.0
        %433 = vmatprep.subr.mxu0 0.0
        %434 = vmatpush2.msra.mxu0 0.0
        %435 = vmatprep.subr.mxu0 0.0
        %436 = vmatpush2.msra.mxu0 0.0
        %437 = vmatprep.subr.mxu0 0.0
        %438 = vmatpush2.msra.mxu0 0.0
        %439 = vmatprep.subr.mxu0 0.0
        %440 = vmatpush2.msra.mxu0 0.0
        %441 = vmatprep.subr.mxu0 0.0
        %442 = vmatpush2.msra.mxu0 0.0
        %443 = vmatprep.mubr.f32.mxu0 0.0
        %444 = vmatmul.mubr.f32.gmra.mxu0 %v352
        %v445 = vpop.f32.mrf.mxu0
        %v446 = vadd.f32 %v377, %v445
        %v447 = vpop.f32.mrf.mxu0
        %448 = vmatprep.mubr.f32.mxu0 0.0
        %449 = vmatmul.mubr.f32.gmra.mxu0 %v353
        %v450 = vpop.f32.mrf.mxu0
        %v451 = vadd.f32 %v377, %v450
        %v452 = vpop.f32.mrf.mxu0
        %453 = vmatprep.mubr.f32.mxu0 0.0
        %454 = vmatmul.mubr.f32.gmra.mxu0 %v354
        %v455 = vpop.f32.mrf.mxu0
        %v456 = vadd.f32 %v377, %v455
        %v457 = vpop.f32.mrf.mxu0
        %458 = vmatprep.mubr.f32.mxu0 0.0
        %459 = vmatmul.mubr.f32.gmra.mxu0 %v355
        %v460 = vpop.f32.mrf.mxu0
        %v461 = vadd.f32 %v377, %v460
        %v462 = vpop.f32.mrf.mxu0
        %463 = vdwg.mxu0
        %464 = vst [vmem:[%s233] sm:$0xff] %v446
        %465 = vst [vmem:[%s233 + $0x8] sm:$0xff] %v451
        %466 = vst [vmem:[%s233 + $0x10] sm:$0xff] %v456
        %467 = vst [vmem:[%s233 + $0x18] sm:$0xff] %v461
        %s468 = sand.u32 %s138, 1
        %s469 = scalar_lea.sflag [#allocation4], %s468
        %s470 = sand.u32 %s138, 1
        %s471 = smul.addr %s470, 32
        %s472 = scalar_lea.vmem [#allocation5], %s471
        // Predicated region
        $region45: #{tpu_custom_call.1} parent=39 // pred_check
          %p473 = pneg %p148
        $region46: #{tpu_custom_call.1} parent=39 // pred_check_branch
          %475 = sbr.rel (%p473) target = $region48
        $region47: #{tpu_custom_call.1} parent=39 // pred_region
          %s476 = smul.u32 4, %s20
          %s478 = ssub.s32 512, 512
          %479 = vsyncadd %s469, %s478
          %s480 = smul.addr %s476, 128
          %s481 = scalar_lea.hbm %s5, %s480
          %s482 = sshll.u32 %s472, 4
          %s483 = int_to_ptr.vmem [resolvable:$true] %s482
          %488 = dma.vmem_to_hbm [thread:$0]  %s483, 512, %s481, %s469, 128, 128, 8
        $region48: #{tpu_custom_call.1} parent=39 // pred_fallthru
          _
      $region40: #{tpu_custom_call.1} parent=5 // pred_fallthru
        _
      %p489 = scmp.le.s32.totalorder 2, %s15
      // Predicated region
      $region49: #{tpu_custom_call.1} parent=5 // pred_check
        %p490 = pneg %p489
      $region50: #{tpu_custom_call.1} parent=5 // pred_check_branch
        %492 = sbr.rel (%p490) target = $region52
      $region51: #{tpu_custom_call.1} parent=5 // pred_region
        %s493 = ssub.s32 %s15, 2
        // Predicated region
        $region53: #{tpu_custom_call.1} parent=51 // pred_check
          %p494 = pneg %p154
        $region54: #{tpu_custom_call.1} parent=51 // pred_check_branch
          %496 = sbr.rel (%p494) target = $region56
        $region55: #{tpu_custom_call.1} parent=51 // pred_region
          %s497 = sand.u32 %s139, 1
          %s498 = scalar_lea.sflag [#allocation4], %s497
          %s499 = sand.u32 %s139, 1
          %s500 = smul.addr %s499, 32
          %s501 = scalar_lea.vmem [#allocation5], %s500
          %502 = dma.done %s498, 512
        $region56: #{tpu_custom_call.1} parent=51 // pred_fallthru
          _
      $region52: #{tpu_custom_call.1} parent=5 // pred_fallthru
        _
    $region6: #{tpu_custom_call.1} parent=1 // loop_footer
      %s19 = sadd.s32 1, %s15
    $region7: #{tpu_custom_call.1} parent=1 // loop_footer_branch
      %14 = sbr.rel target = $region3
    $region8: #{tpu_custom_call.1} parent=1 // loop_exit
      _
    %503 = vsyncpa [#allocation3], 1
    %s504 = scalar_lea.sflag [#allocation3], 1
    %505 = vsyncpa %s504, 1
    %506 = vsyncpa [#allocation4], 1
    %s507 = scalar_lea.sflag [#allocation4], 1
    %508 = vsyncpa %s507, 1

</llo_original>
